<compile_context>
chip_gen: v6e
topology: v6e:2x2x1
jax: 0.10.0
libtpu: 0.0.40
codegen_flags: <defaults>
</compile_context>

<pallas_src>
import functools

import jax
import jax.numpy as jnp
from jax.experimental import pallas as pl
from jax.experimental.pallas import tpu as pltpu


def _linear_kernel(x_ref, w_ref, b_ref, o_ref):
    # x_ref: (B, D) f32   w_ref: (D, TN) bf16   b_ref: (1, TN) f32   o_ref: (B, TN) f32
    acc = jnp.dot(
        x_ref[...],
        w_ref[...].astype(jnp.float32),          # cheap VPU upcast of the VMEM tile
        preferred_element_type=jnp.float32,
    )
    o_ref[...] = (acc + b_ref[...]).astype(o_ref.dtype)


def _num_column_splits(c_pad):
    """2 on v7x (2 TensorCores/chip) when C is big enough to split, else 1."""
    try:
        kind = jax.devices()[0].device_kind.lower()
    except Exception:
        kind = ""
    if "v7" in kind and c_pad % 256 == 0:
        return 2
    return 1


@functools.partial(jax.jit, static_argnames=("num_splits",))
def _classifier_call(x, w_t_bf16, b_pad, *, num_splits):
    B, D = x.shape
    C_pad = w_t_bf16.shape[1]
    tile_n = C_pad // num_splits
    b2 = b_pad.reshape(1, C_pad)
    return pl.pallas_call(
        _linear_kernel,
        out_shape=jax.ShapeDtypeStruct((B, C_pad), x.dtype),
        grid_spec=pltpu.PrefetchScalarGridSpec(
            num_scalar_prefetch=0,
            grid=(num_splits,),
            in_specs=[
                # full x tile every step (tiny: B x D)
                pl.BlockSpec((B, D), lambda j: (0, 0)),
                # weight column-tile j (bf16, lane-dense)
                pl.BlockSpec((D, tile_n), lambda j: (0, j)),
                # bias column-tile j
                pl.BlockSpec((1, tile_n), lambda j: (0, j)),
            ],
            out_specs=pl.BlockSpec((B, tile_n), lambda j: (0, j)),
        ),
        compiler_params=pltpu.CompilerParams(
            dimension_semantics=("parallel",),
        ),
    )(x, w_t_bf16, b2)


def prepare_params(w, b):
    """Pack PyTorch-style fc.weight (C, D) / fc.bias (C,) for the kernel:
    pre-transposed, class dim padded to a multiple of 128, weight in bf16."""
    C, D = w.shape
    C_pad = ((C + 127) // 128) * 128
    w_t = jnp.zeros((D, C_pad), dtype=jnp.bfloat16)
    w_t = w_t.at[:, :C].set(w.T.astype(jnp.bfloat16))
    b_pad = jnp.zeros((C_pad,), dtype=jnp.float32).at[:C].set(b.astype(jnp.float32))
    return w_t, b_pad


def t2tvit_classifier_forward(x, w_t_bf16, b_pad, num_classes):
    """y = x @ W^T + b  (equivalent to nn.Linear(embed_dim, num_classes))."""
    num_splits = _num_column_splits(w_t_bf16.shape[1])
    y_pad = _classifier_call(x, w_t_bf16, b_pad, num_splits=num_splits)
    return y_pad[:, :num_classes]


def init_params(key, embed_dim, num_classes):
    """Deterministic init mirroring the PyTorch module:
    trunc_normal_(fc.weight, std=0.02); bias drawn small & nonzero here so the
    bias path of the kernel is actually exercised (module inits it to 0)."""
    kw, kb = jax.random.split(key)
    w = 0.02 * jax.random.truncated_normal(
        kw, -2.0, 2.0, (num_classes, embed_dim), dtype=jnp.float32)
    b = 0.1 * jax.random.normal(kb, (num_classes,), dtype=jnp.float32)
    return w, b


if __name__ == "__main__":
    key = jax.random.PRNGKey(0)
    kx, kp = jax.random.split(key)

    batch = 8
    embed_dim = 32
    num_classes = 1000   # real T2T-ViT default; padded to 1024 inside the wrapper

    x = jax.random.normal(kx, (batch, embed_dim), dtype=jnp.float32)
    w, b = init_params(kp, embed_dim, num_classes)   # w: (C, D) like fc.weight

    w_t_bf16, b_pad = prepare_params(w, b)
    y = t2tvit_classifier_forward(x, w_t_bf16, b_pad, num_classes)
    y = jax.block_until_ready(y)

    # correctness check: reference uses the same bf16-rounded weight, full-precision matmul
    w_bf = w.astype(jnp.bfloat16).astype(jnp.float32)
    y_ref = jnp.dot(x, w_bf.T, precision=jax.lax.Precision.HIGHEST) + b

    assert y.shape == (batch, num_classes)
    assert jnp.allclose(y, y_ref, atol=1e-4, rtol=1e-3)

    print("KERNEL_OK")
</pallas_src>

<mosaic_0001>
module attributes {stable_mosaic.version = 11 : i64} {
  func.func @_linear_kernel(%arg0: i32, %arg1: memref<8x32xf32, #tpu.memory_space<vmem>>, %arg2: memref<32x1024xbf16, #tpu.memory_space<vmem>>, %arg3: memref<1x1024xf32, #tpu.memory_space<vmem>>, %arg4: memref<8x1024xf32, #tpu.memory_space<vmem>>) attributes {dimension_semantics = [#tpu.dimension_semantics<parallel>], iteration_bounds = array<i64: 1>, scalar_prefetch = 0 : i64, scratch_operands = 0 : i64, tpu.core_type = #tpu.core_type<tc>, window_params = [{pipeline_mode = #tpu.pipeline_mode<synchronous>, transform_indices = @transform_0, window_bounds = array<i64: 8, 32>}, {transform_indices = @transform_1, window_bounds = array<i64: 32, 1024>}, {transform_indices = @transform_2, window_bounds = array<i64: 1, 1024>}, {transform_indices = @transform_3, window_bounds = array<i64: 8, 1024>}]} {
    %c0 = arith.constant 0 : index
    %c0_0 = arith.constant 0 : index
    %0 = vector.load %arg1[%c0, %c0_0] : memref<8x32xf32, #tpu.memory_space<vmem>>, vector<8x32xf32>
    %c0_1 = arith.constant 0 : index
    %c0_2 = arith.constant 0 : index
    %1 = vector.load %arg2[%c0_1, %c0_2] : memref<32x1024xbf16, #tpu.memory_space<vmem>>, vector<32x1024xbf16>
    %2 = arith.extf %1 : vector<32x1024xbf16> to vector<32x1024xf32>
    %cst = arith.constant dense<0.000000e+00> : vector<8x1024xf32>
    %3 = tpu.matmul %0, %2, %cst {dimension_numbers = #tpu.dot_dimension_numbers<[1], [0], [0], [1], [0, 0, 1, 1], [], []>} : vector<8x32xf32>, vector<32x1024xf32>, vector<8x1024xf32> -> vector<8x1024xf32>
    %c0_3 = arith.constant 0 : index
    %c0_4 = arith.constant 0 : index
    %4 = vector.load %arg3[%c0_3, %c0_4] : memref<1x1024xf32, #tpu.memory_space<vmem>>, vector<1x1024xf32>
    %5 = vector.broadcast %4 : vector<1x1024xf32> to vector<8x1024xf32>
    %6 = arith.addf %3, %5 : vector<8x1024xf32>
    %c0_5 = arith.constant 0 : index
    %c0_6 = arith.constant 0 : index
    %7 = vector.load %arg4[%c0_5, %c0_6] : memref<8x1024xf32, #tpu.memory_space<vmem>>, vector<8x1024xf32>
    tpu.vector_store %arg4[%c0_5, %c0_6], %6 {strides = array<i32>} : memref<8x1024xf32, #tpu.memory_space<vmem>>, vector<8x1024xf32>,
    return
  }
  func.func @transform_0(%arg0: i32) -> (i32, i32) {
    %c0_i32 = arith.constant 0 : i32
    %c0_i32_0 = arith.constant 0 : i32
    %c0_i32_1 = arith.constant 0 : i32
    return %c0_i32, %c0_i32_0 : i32, i32
  }
  func.func @transform_1(%arg0: i32) -> (i32, i32) {
    %c0_i32 = arith.constant 0 : i32
    %c0_i32_0 = arith.constant 0 : i32
    return %c0_i32, %arg0 : i32, i32
  }
  func.func @transform_2(%arg0: i32) -> (i32, i32) {
    %c0_i32 = arith.constant 0 : i32
    %c0_i32_0 = arith.constant 0 : i32
    return %c0_i32, %arg0 : i32, i32
  }
  func.func @transform_3(%arg0: i32) -> (i32, i32) {
    %c0_i32 = arith.constant 0 : i32
    %c0_i32_0 = arith.constant 0 : i32
    return %c0_i32, %arg0 : i32, i32
  }
}

</mosaic_0001>

<llo_original>
// kernel: _classifier_call.1
$region0: #{_classifier_call.1}
  #allocation0 [shape = 'u32[]', space=smem, size = 0x4, offset = 0x4, fixed_abs, tag = 'smem constant byte address 0x4 - core index']
  #allocation1 [shape = 'u32[144,128]{1,0:T(1,128)}', space=vmem, size = 0x12000, scoped, tag = 'internal scratch']
  %s0 = inlined_call_operand.hbm [shape: f32[8,32], index: 0, kind: input, shape index: {}]
  %s1 = inlined_call_operand.hbm [shape: bf16[32,1024], index: 1, kind: input, shape index: {}]
  %s2 = inlined_call_operand.hbm [shape: f32[1,1024], index: 2, kind: input, shape index: {}]
  %s3 = inlined_call_operand.hbm [shape: f32[8,1024], index: 3, kind: output, shape index: {}]
  %s4 = sld [smem:[#allocation0]]
  $region34: #{_classifier_call.1} parent=0
    _
  %s6 = ssub.s32 1, %s4
  %s7 = scalar_select 0, %s6, %s4
  $region1: #{_classifier_call.1} parent=0
    #allocation2 [shape = 'u8[4096]{0}', space=vmem, size = 0x1000, scoped, tag = 'input window, operand 0, single buffered']
    #allocation3 [shape = 's32[1]{0}', space=sflag, size = 0x4, scoped, tag = 'scoped memory for _classifier_call.1']
    #allocation4 [shape = 's32[1]{0}', space=sflag, size = 0x4, scoped, tag = 'scoped memory for _classifier_call.1']
    #allocation5 [shape = 'u8[65536]{0}', space=vmem, size = 0x10000, scoped, tag = 'input window, operand 1, single buffered']
    #allocation6 [shape = 's32[1]{0}', space=sflag, size = 0x4, scoped, tag = 'scoped memory for _classifier_call.1']
    #allocation7 [shape = 'u8[4096]{0}', space=vmem, size = 0x1000, scoped, tag = 'input window, operand 2, single buffered']
    #allocation8 [shape = 'u8[32768]{0}', space=vmem, size = 0x8000, scoped, tag = 'output window, operand 0, single buffered']
    %8 = vsyncpa [#allocation3], 0
    %9 = vsyncpa [#allocation6], 0
    %10 = vsyncpa [#allocation4], 0
    // Predicated region
    $region2: #{_classifier_call.1} parent=1 // pred_check
      _
    $region3: #{_classifier_call.1} parent=1 // pred_check_branch
      %12 = sbr.rel (0) target = $region5
    $region4: #{_classifier_call.1} parent=1 // pred_region
      %s14 = ssub.s32 128, 128
      %15 = vsyncadd [#allocation3], %s14
      %s17 = sshll.u32 [#allocation2], 4
      %s18 = int_to_ptr.vmem [resolvable:$true] %s17
      %20 = dma.hbm_to_vmem [thread:$0]  %s0, 128, %s18, [#allocation3]
    $region5: #{_classifier_call.1} parent=1 // pred_fallthru
      _
    // Predicated region
    $region6: #{_classifier_call.1} parent=1 // pred_check
      _
    $region7: #{_classifier_call.1} parent=1 // pred_check_branch
      %22 = sbr.rel (0) target = $region9
    $region8: #{_classifier_call.1} parent=1 // pred_region
      %s24 = ssub.s32 2048, 2048
      %25 = vsyncadd [#allocation6], %s24
      %s26 = sshll.u32 [#allocation5], 4
      %s27 = int_to_ptr.vmem [resolvable:$true] %s26
      %32 = dma.hbm_to_vmem [thread:$0]  %s1, 2048, %s27, [#allocation6], 512, 512, 32
    $region9: #{_classifier_call.1} parent=1 // pred_fallthru
      _
    // Predicated region
    $region10: #{_classifier_call.1} parent=1 // pred_check
      _
    $region11: #{_classifier_call.1} parent=1 // pred_check_branch
      %34 = sbr.rel (0) target = $region13
    $region12: #{_classifier_call.1} parent=1 // pred_region
      %s36 = ssub.s32 128, 128
      %37 = vsyncadd [#allocation6], %s36
      %s39 = sshll.u32 [#allocation7], 4
      %s40 = int_to_ptr.vmem [resolvable:$true] %s39
      %42 = dma.hbm_to_vmem [thread:$0]  %s2, 128, %s40, [#allocation6]
    $region13: #{_classifier_call.1} parent=1 // pred_fallthru
      _
    // Predicated region
    $region14: #{_classifier_call.1} parent=1 // pred_check
      _
    $region15: #{_classifier_call.1} parent=1 // pred_check_branch
      %44 = sbr.rel (0) target = $region17
    $region16: #{_classifier_call.1} parent=1 // pred_region
      %45 = dma.done [#allocation3], 128
    $region17: #{_classifier_call.1} parent=1 // pred_fallthru
      _
    // Predicated region
    $region18: #{_classifier_call.1} parent=1 // pred_check
      _
    $region19: #{_classifier_call.1} parent=1 // pred_check_branch
      %47 = sbr.rel (0) target = $region21
    $region20: #{_classifier_call.1} parent=1 // pred_region
      %48 = dma.done [#allocation6], 2048
    $region21: #{_classifier_call.1} parent=1 // pred_fallthru
      _
    // Predicated region
    $region22: #{_classifier_call.1} parent=1 // pred_check
      _
    $region23: #{_classifier_call.1} parent=1 // pred_check_branch
      %50 = sbr.rel (0) target = $region25
    $region24: #{_classifier_call.1} parent=1 // pred_region
      %51 = dma.done [#allocation6], 128
    $region25: #{_classifier_call.1} parent=1 // pred_fallthru
      _
    %v52 = vld [vmem:[#allocation2] sm:$0xff]
    %v53 = vld [vmem:[#allocation5] sm:$0xff]
    %v54 = vld [vmem:[#allocation5 + $0x8] sm:$0xff]
    %v55 = vld [vmem:[#allocation5 + $0x10] sm:$0xff]
    %v56 = vld [vmem:[#allocation5 + $0x18] sm:$0xff]
    %v57 = vld [vmem:[#allocation5 + $0x20] sm:$0xff]
    %v58 = vld [vmem:[#allocation5 + $0x28] sm:$0xff]
    %v59 = vld [vmem:[#allocation5 + $0x30] sm:$0xff]
    %v60 = vld [vmem:[#allocation5 + $0x38] sm:$0xff]
    %v61 = vld [vmem:[#allocation5 + $0x40] sm:$0xff]
    %v62 = vld [vmem:[#allocation5 + $0x48] sm:$0xff]
    %v63 = vld [vmem:[#allocation5 + $0x50] sm:$0xff]
    %v64 = vld [vmem:[#allocation5 + $0x58] sm:$0xff]
    %v65 = vld [vmem:[#allocation5 + $0x60] sm:$0xff]
    %v66 = vld [vmem:[#allocation5 + $0x68] sm:$0xff]
    %v67 = vld [vmem:[#allocation5 + $0x70] sm:$0xff]
    %v68 = vld [vmem:[#allocation5 + $0x78] sm:$0xff]
    %v69 = vunpack.c.l.bf16 %v53
    %v70 = vunpack.c.h.bf16 %v53
    %v71 = vunpack.c.l.bf16 %v54
    %v72 = vunpack.c.h.bf16 %v54
    %v73 = vunpack.c.l.bf16 %v55
    %v74 = vunpack.c.h.bf16 %v55
    %v75 = vunpack.c.l.bf16 %v56
    %v76 = vunpack.c.h.bf16 %v56
    %v77 = vunpack.c.l.bf16 %v57
    %v78 = vunpack.c.h.bf16 %v57
    %v79 = vunpack.c.l.bf16 %v58
    %v80 = vunpack.c.h.bf16 %v58
    %v81 = vunpack.c.l.bf16 %v59
    %v82 = vunpack.c.h.bf16 %v59
    %v83 = vunpack.c.l.bf16 %v60
    %v84 = vunpack.c.h.bf16 %v60
    %v85 = vunpack.c.l.bf16 %v61
    %v86 = vunpack.c.h.bf16 %v61
    %v87 = vunpack.c.l.bf16 %v62
    %v88 = vunpack.c.h.bf16 %v62
    %v89 = vunpack.c.l.bf16 %v63
    %v90 = vunpack.c.h.bf16 %v63
    %v91 = vunpack.c.l.bf16 %v64
    %v92 = vunpack.c.h.bf16 %v64
    %v93 = vunpack.c.l.bf16 %v65
    %v94 = vunpack.c.h.bf16 %v65
    %v95 = vunpack.c.l.bf16 %v66
    %v96 = vunpack.c.h.bf16 %v66
    %v97 = vunpack.c.l.bf16 %v67
    %v98 = vunpack.c.h.bf16 %v67
    %v99 = vunpack.c.l.bf16 %v68
    %v100 = vunpack.c.h.bf16 %v68
    %v101 = vld [vmem:[#allocation7] sm:$0xff]
    %v103 = vlaneseq
    %v104 = vshrl.u32 %v103, 7
    %v105 = vsub.s32 0, %v104
    %v106 = vrot.slane %v101, %v105
    %v107 = vlaneseq
    %v108 = vshrl.u32 %v107, 7
    %v109 = vsub.s32 1, %v108
    %v110 = vrot.slane %v101, %v109
    %v111 = vlaneseq
    %v112 = vshrl.u32 %v111, 7
    %v113 = vsub.s32 2, %v112
    %v114 = vrot.slane %v101, %v113
    %v115 = vlaneseq
    %v116 = vshrl.u32 %v115, 7
    %v117 = vsub.s32 3, %v116
    %v118 = vrot.slane %v101, %v117
    %v119 = vlaneseq
    %v120 = vshrl.u32 %v119, 7
    %v121 = vsub.s32 4, %v120
    %v122 = vrot.slane %v101, %v121
    %v123 = vlaneseq
    %v124 = vshrl.u32 %v123, 7
    %v125 = vsub.s32 5, %v124
    %v126 = vrot.slane %v101, %v125
    %v127 = vlaneseq
    %v128 = vshrl.u32 %v127, 7
    %v129 = vsub.s32 6, %v128
    %v130 = vrot.slane %v101, %v129
    %v131 = vlaneseq
    %v132 = vshrl.u32 %v131, 7
    %v133 = vsub.s32 7, %v132
    %v134 = vrot.slane %v101, %v133
    %vm143 = vcmask 261120
    %v145 = vsel %vm143, %v52, 0
    %147 = vmatprep.subr.mxu0 0.0
    %148 = vmatpush1.msra.mxu0 0.0
    %149 = vmatprep.subr.mxu0 0.0
    %150 = vmatpush1.msra.mxu0 0.0
    %151 = vmatprep.subr.mxu0 0.0
    %152 = vmatpush1.msra.mxu0 0.0
    %153 = vmatprep.subr.mxu0 0.0
    %154 = vmatpush1.msra.mxu0 0.0
    %155 = vmatprep.subr.mxu0 0.0
    %156 = vmatpush1.msra.mxu0 0.0
    %157 = vmatprep.subr.mxu0 0.0
    %158 = vmatpush1.msra.mxu0 0.0
    %159 = vmatprep.subr.mxu0 0.0
    %160 = vmatpush1.msra.mxu0 0.0
    %161 = vmatprep.subr.mxu0 0.0
    %162 = vmatpush1.msra.mxu0 0.0
    %163 = vmatprep.subr.mxu0 0.0
    %164 = vmatpush1.msra.mxu0 0.0
    %165 = vmatprep.subr.mxu0 0.0
    %166 = vmatpush1.msra.mxu0 0.0
    %167 = vmatprep.subr.mxu0 0.0
    %168 = vmatpush1.msra.mxu0 0.0
    %169 = vmatprep.subr.mxu0 0.0
    %170 = vmatpush1.msra.mxu0 0.0
    %171 = vmatprep.subr.mxu0 %v94
    %172 = vmatpush1.msra.mxu0 %v93
    %173 = vmatprep.subr.mxu0 %v86
    %174 = vmatpush1.msra.mxu0 %v85
    %175 = vmatprep.subr.mxu0 %v78
    %176 = vmatpush1.msra.mxu0 %v77
    %177 = vmatprep.subr.mxu0 %v70
    %178 = vmatpush1.msra.mxu0 %v69
    %179 = vmatprep.subr.mxu0 0.0
    %180 = vmatpush2.msra.mxu0 0.0
    %181 = vmatprep.subr.mxu0 0.0
    %182 = vmatpush2.msra.mxu0 0.0
    %183 = vmatprep.subr.mxu0 0.0
    %184 = vmatpush2.msra.mxu0 0.0
    %185 = vmatprep.subr.mxu0 0.0
    %186 = vmatpush2.msra.mxu0 0.0
    %187 = vmatprep.subr.mxu0 0.0
    %188 = vmatpush2.msra.mxu0 0.0
    %189 = vmatprep.subr.mxu0 0.0
    %190 = vmatpush2.msra.mxu0 0.0
    %191 = vmatprep.subr.mxu0 0.0
    %192 = vmatpush2.msra.mxu0 0.0
    %193 = vmatprep.subr.mxu0 0.0
    %194 = vmatpush2.msra.mxu0 0.0
    %195 = vmatprep.subr.mxu0 0.0
    %196 = vmatpush2.msra.mxu0 0.0
    %197 = vmatprep.subr.mxu0 0.0
    %198 = vmatpush2.msra.mxu0 0.0
    %199 = vmatprep.subr.mxu0 0.0
    %200 = vmatpush2.msra.mxu0 0.0
    %201 = vmatprep.subr.mxu0 0.0
    %202 = vmatpush2.msra.mxu0 0.0
    %203 = vmatprep.subr.mxu0 0.0
    %204 = vmatpush2.msra.mxu0 0.0
    %205 = vmatprep.subr.mxu0 0.0
    %206 = vmatpush2.msra.mxu0 0.0
    %207 = vmatprep.subr.mxu0 0.0
    %208 = vmatpush2.msra.mxu0 0.0
    %209 = vmatprep.subr.mxu0 0.0
    %210 = vmatpush2.msra.mxu0 0.0
    %211 = vmatprep.mubr.f32.mxu0 0.0
    %212 = vmatmul.mubr.f32.gmra.mxu0 %v145
    %v213 = vpop.f32.mrf.mxu0
    %v214 = vadd.f32 %v106, %v213
    %v215 = vpop.f32.mrf.mxu0
    %v216 = vadd.f32 %v110, %v215
    %217 = vdwg.mxu0
    %218 = vmatprep.subr.mxu0 0.0
    %219 = vmatpush1.msra.mxu0 0.0
    %220 = vmatprep.subr.mxu0 0.0
    %221 = vmatpush1.msra.mxu0 0.0
    %222 = vmatprep.subr.mxu0 0.0
    %223 = vmatpush1.msra.mxu0 0.0
    %224 = vmatprep.subr.mxu0 0.0
    %225 = vmatpush1.msra.mxu0 0.0
    %226 = vmatprep.subr.mxu0 0.0
    %227 = vmatpush1.msra.mxu0 0.0
    %228 = vmatprep.subr.mxu0 0.0
    %229 = vmatpush1.msra.mxu0 0.0
    %230 = vmatprep.subr.mxu0 0.0
    %231 = vmatpush1.msra.mxu0 0.0
    %232 = vmatprep.subr.mxu0 0.0
    %233 = vmatpush1.msra.mxu0 0.0
    %234 = vmatprep.subr.mxu0 0.0
    %235 = vmatpush1.msra.mxu0 0.0
    %236 = vmatprep.subr.mxu0 0.0
    %237 = vmatpush1.msra.mxu0 0.0
    %238 = vmatprep.subr.mxu0 0.0
    %239 = vmatpush1.msra.mxu0 0.0
    %240 = vmatprep.subr.mxu0 0.0
    %241 = vmatpush1.msra.mxu0 0.0
    %242 = vmatprep.subr.mxu0 %v96
    %243 = vmatpush1.msra.mxu0 %v95
    %244 = vmatprep.subr.mxu0 %v88
    %245 = vmatpush1.msra.mxu0 %v87
    %246 = vmatprep.subr.mxu0 %v80
    %247 = vmatpush1.msra.mxu0 %v79
    %248 = vmatprep.subr.mxu0 %v72
    %249 = vmatpush1.msra.mxu0 %v71
    %250 = vmatprep.subr.mxu0 0.0
    %251 = vmatpush2.msra.mxu0 0.0
    %252 = vmatprep.subr.mxu0 0.0
    %253 = vmatpush2.msra.mxu0 0.0
    %254 = vmatprep.subr.mxu0 0.0
    %255 = vmatpush2.msra.mxu0 0.0
    %256 = vmatprep.subr.mxu0 0.0
    %257 = vmatpush2.msra.mxu0 0.0
    %258 = vmatprep.subr.mxu0 0.0
    %259 = vmatpush2.msra.mxu0 0.0
    %260 = vmatprep.subr.mxu0 0.0
    %261 = vmatpush2.msra.mxu0 0.0
    %262 = vmatprep.subr.mxu0 0.0
    %263 = vmatpush2.msra.mxu0 0.0
    %264 = vmatprep.subr.mxu0 0.0
    %265 = vmatpush2.msra.mxu0 0.0
    %266 = vmatprep.subr.mxu0 0.0
    %267 = vmatpush2.msra.mxu0 0.0
    %268 = vmatprep.subr.mxu0 0.0
    %269 = vmatpush2.msra.mxu0 0.0
    %270 = vmatprep.subr.mxu0 0.0
    %271 = vmatpush2.msra.mxu0 0.0
    %272 = vmatprep.subr.mxu0 0.0
    %273 = vmatpush2.msra.mxu0 0.0
    %274 = vmatprep.subr.mxu0 0.0
    %275 = vmatpush2.msra.mxu0 0.0
    %276 = vmatprep.subr.mxu0 0.0
    %277 = vmatpush2.msra.mxu0 0.0
    %278 = vmatprep.subr.mxu0 0.0
    %279 = vmatpush2.msra.mxu0 0.0
    %280 = vmatprep.subr.mxu0 0.0
    %281 = vmatpush2.msra.mxu0 0.0
    %282 = vmatprep.mubr.f32.mxu0 0.0
    %283 = vmatmul.mubr.f32.gmra.mxu0 %v145
    %v284 = vpop.f32.mrf.mxu0
    %v285 = vadd.f32 %v114, %v284
    %v286 = vpop.f32.mrf.mxu0
    %v287 = vadd.f32 %v118, %v286
    %288 = vdwg.mxu0
    %289 = vmatprep.subr.mxu0 0.0
    %290 = vmatpush1.msra.mxu0 0.0
    %291 = vmatprep.subr.mxu0 0.0
    %292 = vmatpush1.msra.mxu0 0.0
    %293 = vmatprep.subr.mxu0 0.0
    %294 = vmatpush1.msra.mxu0 0.0
    %295 = vmatprep.subr.mxu0 0.0
    %296 = vmatpush1.msra.mxu0 0.0
    %297 = vmatprep.subr.mxu0 0.0
    %298 = vmatpush1.msra.mxu0 0.0
    %299 = vmatprep.subr.mxu0 0.0
    %300 = vmatpush1.msra.mxu0 0.0
    %301 = vmatprep.subr.mxu0 0.0
    %302 = vmatpush1.msra.mxu0 0.0
    %303 = vmatprep.subr.mxu0 0.0
    %304 = vmatpush1.msra.mxu0 0.0
    %305 = vmatprep.subr.mxu0 0.0
    %306 = vmatpush1.msra.mxu0 0.0
    %307 = vmatprep.subr.mxu0 0.0
    %308 = vmatpush1.msra.mxu0 0.0
    %309 = vmatprep.subr.mxu0 0.0
    %310 = vmatpush1.msra.mxu0 0.0
    %311 = vmatprep.subr.mxu0 0.0
    %312 = vmatpush1.msra.mxu0 0.0
    %313 = vmatprep.subr.mxu0 %v98
    %314 = vmatpush1.msra.mxu0 %v97
    %315 = vmatprep.subr.mxu0 %v90
    %316 = vmatpush1.msra.mxu0 %v89
    %317 = vmatprep.subr.mxu0 %v82
    %318 = vmatpush1.msra.mxu0 %v81
    %319 = vmatprep.subr.mxu0 %v74
    %320 = vmatpush1.msra.mxu0 %v73
    %321 = vmatprep.subr.mxu0 0.0
    %322 = vmatpush2.msra.mxu0 0.0
    %323 = vmatprep.subr.mxu0 0.0
    %324 = vmatpush2.msra.mxu0 0.0
    %325 = vmatprep.subr.mxu0 0.0
    %326 = vmatpush2.msra.mxu0 0.0
    %327 = vmatprep.subr.mxu0 0.0
    %328 = vmatpush2.msra.mxu0 0.0
    %329 = vmatprep.subr.mxu0 0.0
    %330 = vmatpush2.msra.mxu0 0.0
    %331 = vmatprep.subr.mxu0 0.0
    %332 = vmatpush2.msra.mxu0 0.0
    %333 = vmatprep.subr.mxu0 0.0
    %334 = vmatpush2.msra.mxu0 0.0
    %335 = vmatprep.subr.mxu0 0.0
    %336 = vmatpush2.msra.mxu0 0.0
    %337 = vmatprep.subr.mxu0 0.0
    %338 = vmatpush2.msra.mxu0 0.0
    %339 = vmatprep.subr.mxu0 0.0
    %340 = vmatpush2.msra.mxu0 0.0
    %341 = vmatprep.subr.mxu0 0.0
    %342 = vmatpush2.msra.mxu0 0.0
    %343 = vmatprep.subr.mxu0 0.0
    %344 = vmatpush2.msra.mxu0 0.0
    %345 = vmatprep.subr.mxu0 0.0
    %346 = vmatpush2.msra.mxu0 0.0
    %347 = vmatprep.subr.mxu0 0.0
    %348 = vmatpush2.msra.mxu0 0.0
    %349 = vmatprep.subr.mxu0 0.0
    %350 = vmatpush2.msra.mxu0 0.0
    %351 = vmatprep.subr.mxu0 0.0
    %352 = vmatpush2.msra.mxu0 0.0
    %353 = vmatprep.mubr.f32.mxu0 0.0
    %354 = vmatmul.mubr.f32.gmra.mxu0 %v145
    %v355 = vpop.f32.mrf.mxu0
    %v356 = vadd.f32 %v122, %v355
    %v357 = vpop.f32.mrf.mxu0
    %v358 = vadd.f32 %v126, %v357
    %359 = vdwg.mxu0
    %360 = vmatprep.subr.mxu0 0.0
    %361 = vmatpush1.msra.mxu0 0.0
    %362 = vmatprep.subr.mxu0 0.0
    %363 = vmatpush1.msra.mxu0 0.0
    %364 = vmatprep.subr.mxu0 0.0
    %365 = vmatpush1.msra.mxu0 0.0
    %366 = vmatprep.subr.mxu0 0.0
    %367 = vmatpush1.msra.mxu0 0.0
    %368 = vmatprep.subr.mxu0 0.0
    %369 = vmatpush1.msra.mxu0 0.0
    %370 = vmatprep.subr.mxu0 0.0
    %371 = vmatpush1.msra.mxu0 0.0
    %372 = vmatprep.subr.mxu0 0.0
    %373 = vmatpush1.msra.mxu0 0.0
    %374 = vmatprep.subr.mxu0 0.0
    %375 = vmatpush1.msra.mxu0 0.0
    %376 = vmatprep.subr.mxu0 0.0
    %377 = vmatpush1.msra.mxu0 0.0
    %378 = vmatprep.subr.mxu0 0.0
    %379 = vmatpush1.msra.mxu0 0.0
    %380 = vmatprep.subr.mxu0 0.0
    %381 = vmatpush1.msra.mxu0 0.0
    %382 = vmatprep.subr.mxu0 0.0
    %383 = vmatpush1.msra.mxu0 0.0
    %384 = vmatprep.subr.mxu0 %v100
    %385 = vmatpush1.msra.mxu0 %v99
    %386 = vmatprep.subr.mxu0 %v92
    %387 = vmatpush1.msra.mxu0 %v91
    %388 = vmatprep.subr.mxu0 %v84
    %389 = vmatpush1.msra.mxu0 %v83
    %390 = vmatprep.subr.mxu0 %v76
    %391 = vmatpush1.msra.mxu0 %v75
    %392 = vmatprep.subr.mxu0 0.0
    %393 = vmatpush2.msra.mxu0 0.0
    %394 = vmatprep.subr.mxu0 0.0
    %395 = vmatpush2.msra.mxu0 0.0
    %396 = vmatprep.subr.mxu0 0.0
    %397 = vmatpush2.msra.mxu0 0.0
    %398 = vmatprep.subr.mxu0 0.0
    %399 = vmatpush2.msra.mxu0 0.0
    %400 = vmatprep.subr.mxu0 0.0
    %401 = vmatpush2.msra.mxu0 0.0
    %402 = vmatprep.subr.mxu0 0.0
    %403 = vmatpush2.msra.mxu0 0.0
    %404 = vmatprep.subr.mxu0 0.0
    %405 = vmatpush2.msra.mxu0 0.0
    %406 = vmatprep.subr.mxu0 0.0
    %407 = vmatpush2.msra.mxu0 0.0
    %408 = vmatprep.subr.mxu0 0.0
    %409 = vmatpush2.msra.mxu0 0.0
    %410 = vmatprep.subr.mxu0 0.0
    %411 = vmatpush2.msra.mxu0 0.0
    %412 = vmatprep.subr.mxu0 0.0
    %413 = vmatpush2.msra.mxu0 0.0
    %414 = vmatprep.subr.mxu0 0.0
    %415 = vmatpush2.msra.mxu0 0.0
    %416 = vmatprep.subr.mxu0 0.0
    %417 = vmatpush2.msra.mxu0 0.0
    %418 = vmatprep.subr.mxu0 0.0
    %419 = vmatpush2.msra.mxu0 0.0
    %420 = vmatprep.subr.mxu0 0.0
    %421 = vmatpush2.msra.mxu0 0.0
    %422 = vmatprep.subr.mxu0 0.0
    %423 = vmatpush2.msra.mxu0 0.0
    %424 = vmatprep.mubr.f32.mxu0 0.0
    %425 = vmatmul.mubr.f32.gmra.mxu0 %v145
    %v426 = vpop.f32.mrf.mxu0
    %v427 = vadd.f32 %v130, %v426
    %v428 = vpop.f32.mrf.mxu0
    %v429 = vadd.f32 %v134, %v428
    %430 = vdwg.mxu0
    %431 = vst [vmem:[#allocation8] sm:$0xff] %v214
    %432 = vst [vmem:[#allocation8 + $0x8] sm:$0xff] %v216
    %433 = vst [vmem:[#allocation8 + $0x10] sm:$0xff] %v285
    %434 = vst [vmem:[#allocation8 + $0x18] sm:$0xff] %v287
    %435 = vst [vmem:[#allocation8 + $0x20] sm:$0xff] %v356
    %436 = vst [vmem:[#allocation8 + $0x28] sm:$0xff] %v358
    %437 = vst [vmem:[#allocation8 + $0x30] sm:$0xff] %v427
    %438 = vst [vmem:[#allocation8 + $0x38] sm:$0xff] %v429
    // Predicated region
    $region26: #{_classifier_call.1} parent=1 // pred_check
      _
    $region27: #{_classifier_call.1} parent=1 // pred_check_branch
      %440 = sbr.rel (0) target = $region29
    $region28: #{_classifier_call.1} parent=1 // pred_region
      %s442 = ssub.s32 1024, 1024
      %443 = vsyncadd [#allocation4], %s442
      %s445 = sshll.u32 [#allocation8], 4
      %s446 = int_to_ptr.vmem [resolvable:$true] %s445
      %448 = dma.vmem_to_hbm [thread:$0]  %s446, 1024, %s3, [#allocation4]
    $region29: #{_classifier_call.1} parent=1 // pred_fallthru
      _
    // Predicated region
    $region30: #{_classifier_call.1} parent=1 // pred_check
      _
    $region31: #{_classifier_call.1} parent=1 // pred_check_branch
      %450 = sbr.rel (0) target = $region33
    $region32: #{_classifier_call.1} parent=1 // pred_region
      %451 = dma.done [#allocation4], 1024
    $region33: #{_classifier_call.1} parent=1 // pred_fallthru
      _
    %452 = vsyncpa [#allocation3], 1
    %453 = vsyncpa [#allocation6], 1
    %454 = vsyncpa [#allocation4], 1

</llo_original>
